<compile_context>
chip_gen: v7x
topology: tpu7x:2x2x1
jax: 0.10.0
libtpu: 0.0.40
codegen_flags: <defaults>
</compile_context>

<pallas_src>
import functools

import jax
import jax.numpy as jnp
from jax.experimental import pallas as pl
from jax.experimental.pallas import tpu as pltpu

H1 = 128   # fc1 output width
H2 = 256   # fc2 output width


def _round_up(x, m):
    return (x + m - 1) // m * m


def _layout(latent_size, state_size):
    """Row offsets of each parameter segment in the packed [rows, lanes] slab.

    All row offsets are multiples of 8 (f32 sublane alignment); all segments
    start at lane 0, so in-kernel slices select whole (8,128) tiles.
    """
    l_pad = _round_up(max(latent_size, 8), 8)
    s_pad = _round_up(state_size, 128)
    lanes = max(H2, s_pad)
    r_w1 = 0
    r_b1 = r_w1 + l_pad
    r_w2 = r_b1 + 8
    r_b2 = r_w2 + H1
    r_w3 = r_b2 + 8
    r_b3 = r_w3 + H2
    rows = r_b3 + 8
    return dict(l_pad=l_pad, s_pad=s_pad, lanes=lanes, rows=rows,
                r_w1=r_w1, r_b1=r_b1, r_w2=r_w2, r_b2=r_b2,
                r_w3=r_w3, r_b3=r_b3)


def pack_decoder_params(params, latent_size, state_size):
    """Pack (w1,b1,w2,b2,w3,b3) into one lane-dense f32 slab (single DMA).

    Weights are stored pre-transposed [in, out]; padded regions are zero so
    the padded rows/cols contribute nothing to the matmuls.
    """
    w1, b1, w2, b2, w3, b3 = params
    L = _layout(latent_size, state_size)
    buf = jnp.zeros((L["rows"], L["lanes"]), jnp.float32)
    buf = buf.at[L["r_w1"]:L["r_w1"] + latent_size, :H1].set(w1)
    buf = buf.at[L["r_b1"], :H1].set(b1.reshape(-1))
    buf = buf.at[L["r_w2"]:L["r_w2"] + H1, :H2].set(w2)
    buf = buf.at[L["r_b2"], :H2].set(b2.reshape(-1))
    buf = buf.at[L["r_w3"]:L["r_w3"] + H2, :state_size].set(w3)
    buf = buf.at[L["r_b3"], :state_size].set(b3.reshape(-1))
    return buf


def _decoder_kernel(x_ref, p_ref, o_ref, *, L):
    """x_ref: [TB, l_pad]  p_ref: [rows, lanes]  o_ref: [TB, s_pad]."""
    l_pad, s_pad = L["l_pad"], L["s_pad"]
    x = x_ref[...]

    # fc1 + ReLU:  [TB, l_pad] @ [l_pad, 128]
    w1 = p_ref[L["r_w1"]:L["r_w1"] + l_pad, 0:H1]
    b1 = p_ref[L["r_b1"]:L["r_b1"] + 1, 0:H1]
    h1 = jnp.dot(x, w1, preferred_element_type=jnp.float32)
    h1 = jnp.maximum(h1 + b1, 0.0)

    # fc2 + ReLU:  [TB, 128] @ [128, 256]
    w2 = p_ref[L["r_w2"]:L["r_w2"] + H1, 0:H2]
    b2 = p_ref[L["r_b2"]:L["r_b2"] + 1, 0:H2]
    h2 = jnp.dot(h1, w2, preferred_element_type=jnp.float32)
    h2 = jnp.maximum(h2 + b2, 0.0)

    # fc3 + sigmoid:  [TB, 256] @ [256, s_pad]  -> single lane-dense store
    w3 = p_ref[L["r_w3"]:L["r_w3"] + H2, 0:s_pad]
    b3 = p_ref[L["r_b3"]:L["r_b3"] + 1, 0:s_pad]
    logits = jnp.dot(h2, w3, preferred_element_type=jnp.float32) + b3
    o_ref[...] = jax.nn.sigmoid(logits).astype(o_ref.dtype)


def decoder_forward(x, packed_params, latent_size, state_size):
    """x: [B, latent_size] f32 -> reconstruction [B, state_size] f32."""
    B = x.shape[0]
    L = _layout(latent_size, state_size)
    l_pad, s_pad = L["l_pad"], L["s_pad"]

    # Batch tiling: rows padded to a multiple of 8; large batches are split
    # into <=512-row tiles so activation DMA pipelines against compute.
    b_pad8 = _round_up(B, 8)
    tb = min(512, b_pad8)
    b_pad = _round_up(B, tb)

    x_pad = jnp.pad(x.astype(jnp.float32),
                    ((0, b_pad - B), (0, l_pad - latent_size)))

    flops = 2 * b_pad * (l_pad * H1 + H1 * H2 + H2 * s_pad) \
        + 4 * b_pad * (H1 + H2 + s_pad)
    bytes_accessed = (x_pad.size + packed_params.size + b_pad * s_pad) * 4
    cost = pl.CostEstimate(flops=flops,
                           transcendentals=b_pad * s_pad,
                           bytes_accessed=bytes_accessed)

    out_pad = pl.pallas_call(
        functools.partial(_decoder_kernel, L=L),
        out_shape=jax.ShapeDtypeStruct((b_pad, s_pad), jnp.float32),
        grid_spec=pltpu.PrefetchScalarGridSpec(
            num_scalar_prefetch=0,
            grid=(b_pad // tb,),
            in_specs=[
                # activations: one tile per grid step (pipelined)
                pl.BlockSpec((tb, l_pad), lambda i: (i, 0)),
                # packed params: constant block index -> resident in VMEM
                pl.BlockSpec((L["rows"], L["lanes"]), lambda i: (0, 0)),
            ],
            out_specs=pl.BlockSpec((tb, s_pad), lambda i: (i, 0)),
        ),
        compiler_params=pltpu.CompilerParams(
            dimension_semantics=("parallel",),   # shards batch grid across TCs on v7x
        ),
        cost_estimate=cost,
    )(x_pad, packed_params)

    # Strip batch/lane padding (padded lanes hold sigmoid(0)=0.5, discarded).
    return out_pad[:B, :state_size]


def init_params(key, latent_size, state_size):
    """Deterministic synthetic params. Weights pre-transposed [in, out];
    biases [1, out]."""
    ks = jax.random.split(key, 6)
    dims = [(latent_size, H1), (H1, H2), (H2, state_size)]
    params = []
    for i, (din, dout) in enumerate(dims):
        w = jax.random.normal(ks[2 * i], (din, dout), jnp.float32) * (1.0 / jnp.sqrt(din))
        b = jax.random.normal(ks[2 * i + 1], (1, dout), jnp.float32) * 0.01
        params += [w, b]
    return tuple(params)


def decoder_reference(x, params):
    w1, b1, w2, b2, w3, b3 = params
    h = jax.nn.relu(x @ w1 + b1)
    h = jax.nn.relu(h @ w2 + b2)
    return jax.nn.sigmoid(h @ w3 + b3)


if __name__ == "__main__":
    key = jax.random.PRNGKey(0)
    k_in, k_params = jax.random.split(key)

    batch = 8
    latent_size = 16
    state_size = 32

    x = jax.random.normal(k_in, (batch, latent_size), jnp.float32)
    params = init_params(k_params, latent_size, state_size)
    packed = pack_decoder_params(params, latent_size, state_size)

    out = decoder_forward(x, packed, latent_size, state_size)
    out = jax.block_until_ready(out)

    ref = decoder_reference(x, params)
    assert out.shape == (batch, state_size)
    assert jnp.allclose(out, ref, atol=1e-5, rtol=1e-5)

    print("KERNEL_OK")
</pallas_src>

<mosaic_0001>
module attributes {stable_mosaic.version = 11 : i64} {
  func.func @_decoder_kernel(%arg0: i32, %arg1: memref<8x16xf32, #tpu.memory_space<vmem>>, %arg2: memref<424x256xf32, #tpu.memory_space<vmem>>, %arg3: memref<8x128xf32, #tpu.memory_space<vmem>>) attributes {dimension_semantics = [#tpu.dimension_semantics<parallel>], iteration_bounds = array<i64: 1>, scalar_prefetch = 0 : i64, scratch_operands = 0 : i64, tpu.core_type = #tpu.core_type<tc>, window_params = [{transform_indices = @transform_0, window_bounds = array<i64: 8, 16>}, {pipeline_mode = #tpu.pipeline_mode<synchronous>, transform_indices = @transform_1, window_bounds = array<i64: 424, 256>}, {transform_indices = @transform_2, window_bounds = array<i64: 8, 128>}]} {
    %c0 = arith.constant 0 : index
    %c0_0 = arith.constant 0 : index
    %0 = vector.load %arg1[%c0, %c0_0] : memref<8x16xf32, #tpu.memory_space<vmem>>, vector<8x16xf32>
    %c0_1 = arith.constant 0 : index
    %c0_2 = arith.constant 0 : index
    %1 = vector.load %arg2[%c0_1, %c0_2] : memref<424x256xf32, #tpu.memory_space<vmem>>, vector<16x128xf32>
    %c16 = arith.constant 16 : index
    %c0_3 = arith.constant 0 : index
    %2 = vector.load %arg2[%c16, %c0_3] : memref<424x256xf32, #tpu.memory_space<vmem>>, vector<1x128xf32>
    %cst = arith.constant dense<0.000000e+00> : vector<8x128xf32>
    %3 = tpu.matmul %0, %1, %cst {dimension_numbers = #tpu.dot_dimension_numbers<[1], [0], [0], [1], [0, 0, 1, 1], [], []>} : vector<8x16xf32>, vector<16x128xf32>, vector<8x128xf32> -> vector<8x128xf32>
    %4 = vector.broadcast %2 : vector<1x128xf32> to vector<8x128xf32>
    %5 = arith.addf %3, %4 : vector<8x128xf32>
    %cst_4 = arith.constant 0.000000e+00 : f32
    %6 = vector.broadcast %cst_4 : f32 to vector<8x128xf32>
    %7 = arith.maximumf %5, %6 : vector<8x128xf32>
    %c24 = arith.constant 24 : index
    %c0_5 = arith.constant 0 : index
    %8 = vector.load %arg2[%c24, %c0_5] : memref<424x256xf32, #tpu.memory_space<vmem>>, vector<128x256xf32>
    %c152 = arith.constant 152 : index
    %c0_6 = arith.constant 0 : index
    %9 = vector.load %arg2[%c152, %c0_6] : memref<424x256xf32, #tpu.memory_space<vmem>>, vector<1x256xf32>
    %cst_7 = arith.constant dense<0.000000e+00> : vector<8x256xf32>
    %10 = tpu.matmul %7, %8, %cst_7 {dimension_numbers = #tpu.dot_dimension_numbers<[1], [0], [0], [1], [0, 0, 1, 1], [], []>} : vector<8x128xf32>, vector<128x256xf32>, vector<8x256xf32> -> vector<8x256xf32>
    %11 = vector.broadcast %9 : vector<1x256xf32> to vector<8x256xf32>
    %12 = arith.addf %10, %11 : vector<8x256xf32>
    %cst_8 = arith.constant 0.000000e+00 : f32
    %13 = vector.broadcast %cst_8 : f32 to vector<8x256xf32>
    %14 = arith.maximumf %12, %13 : vector<8x256xf32>
    %c160 = arith.constant 160 : index
    %c0_9 = arith.constant 0 : index
    %15 = vector.load %arg2[%c160, %c0_9] : memref<424x256xf32, #tpu.memory_space<vmem>>, vector<256x128xf32>
    %c416 = arith.constant 416 : index
    %c0_10 = arith.constant 0 : index
    %16 = vector.load %arg2[%c416, %c0_10] : memref<424x256xf32, #tpu.memory_space<vmem>>, vector<1x128xf32>
    %cst_11 = arith.constant dense<0.000000e+00> : vector<8x128xf32>
    %17 = tpu.matmul %14, %15, %cst_11 {dimension_numbers = #tpu.dot_dimension_numbers<[1], [0], [0], [1], [0, 0, 1, 1], [], []>} : vector<8x256xf32>, vector<256x128xf32>, vector<8x128xf32> -> vector<8x128xf32>
    %18 = vector.broadcast %16 : vector<1x128xf32> to vector<8x128xf32>
    %19 = arith.addf %17, %18 : vector<8x128xf32>
    %20 = arith.negf %19 : vector<8x128xf32>
    %21 = math.exp %20 : vector<8x128xf32>
    %cst_12 = arith.constant 1.000000e+00 : f32
    %22 = vector.broadcast %cst_12 : f32 to vector<8x128xf32>
    %23 = arith.addf %22, %21 : vector<8x128xf32>
    %24 = arith.divf %22, %23 : vector<8x128xf32>
    %c0_13 = arith.constant 0 : index
    %c0_14 = arith.constant 0 : index
    %25 = vector.load %arg3[%c0_13, %c0_14] : memref<8x128xf32, #tpu.memory_space<vmem>>, vector<8x128xf32>
    tpu.vector_store %arg3[%c0_13, %c0_14], %24 {strides = array<i32>} : memref<8x128xf32, #tpu.memory_space<vmem>>, vector<8x128xf32>,
    return
  }
  func.func @transform_0(%arg0: i32) -> (i32, i32) {
    %c0_i32 = arith.constant 0 : i32
    %c0_i32_0 = arith.constant 0 : i32
    return %arg0, %c0_i32 : i32, i32
  }
  func.func @transform_1(%arg0: i32) -> (i32, i32) {
    %c0_i32 = arith.constant 0 : i32
    %c0_i32_0 = arith.constant 0 : i32
    %c0_i32_1 = arith.constant 0 : i32
    return %c0_i32, %c0_i32_0 : i32, i32
  }
  func.func @transform_2(%arg0: i32) -> (i32, i32) {
    %c0_i32 = arith.constant 0 : i32
    %c0_i32_0 = arith.constant 0 : i32
    return %arg0, %c0_i32 : i32, i32
  }
}

</mosaic_0001>

<llo_original>
// kernel: tpu_custom_call.1
$region0: #{tpu_custom_call.1}
  #allocation0 [shape = 'u32[]', space=smem, size = 0x4, offset = 0x4, fixed_abs, tag = 'smem constant byte address 0x4 - core index']
  #allocation1 [shape = 'u32[144,128]{1,0:T(1,128)}', space=vmem, size = 0x12000, scoped, tag = 'internal scratch']
  %s0 = inlined_call_operand.hbm [shape: f32[8,16], index: 0, kind: input, shape index: {}]
  %s1 = inlined_call_operand.hbm [shape: f32[424,256], index: 1, kind: input, shape index: {}]
  %s2 = inlined_call_operand.hbm [shape: f32[8,128], index: 2, kind: output, shape index: {}]
  %s3 = sld [smem:[#allocation0]]
  $region26: #{tpu_custom_call.1} parent=0
    _
  %s5 = ssub.s32 1, %s3
  %s6 = scalar_select 0, %s5, %s3
  $region1: #{tpu_custom_call.1} parent=0
    #allocation2 [shape = 'u8[4096]{0}', space=vmem, size = 0x1000, scoped, tag = 'input window, operand 0, single buffered']
    #allocation3 [shape = 's32[1]{0}', space=sflag, size = 0x4, scoped, tag = 'scoped memory for tpu_custom_call.1']
    #allocation4 [shape = 's32[1]{0}', space=sflag, size = 0x4, scoped, tag = 'scoped memory for tpu_custom_call.1']
    #allocation5 [shape = 'u8[434176]{0}', space=vmem, size = 0x6a000, scoped, tag = 'input window, operand 1, single buffered']
    #allocation6 [shape = 's32[1]{0}', space=sflag, size = 0x4, scoped, tag = 'scoped memory for tpu_custom_call.1']
    #allocation7 [shape = 'u8[4096]{0}', space=vmem, size = 0x1000, scoped, tag = 'output window, operand 0, single buffered']
    %7 = vsyncpa [#allocation3], 0
    %8 = vsyncpa [#allocation6], 0
    %9 = vsyncpa [#allocation4], 0
    // Predicated region
    $region2: #{tpu_custom_call.1} parent=1 // pred_check
      _
    $region3: #{tpu_custom_call.1} parent=1 // pred_check_branch
      %11 = sbr.rel (0) target = $region5
    $region4: #{tpu_custom_call.1} parent=1 // pred_region
      %s13 = ssub.s32 128, 128
      %14 = vsyncadd [#allocation3], %s13
      %s16 = sshll.u32 [#allocation2], 4
      %s17 = int_to_ptr.vmem [resolvable:$true] %s16
      %19 = dma.hbm_to_vmem [thread:$0]  %s0, 128, %s17, [#allocation3]
    $region5: #{tpu_custom_call.1} parent=1 // pred_fallthru
      _
    // Predicated region
    $region6: #{tpu_custom_call.1} parent=1 // pred_check
      _
    $region7: #{tpu_custom_call.1} parent=1 // pred_check_branch
      %21 = sbr.rel (0) target = $region9
    $region8: #{tpu_custom_call.1} parent=1 // pred_region
      %s23 = ssub.s32 13568, 13568
      %24 = vsyncadd [#allocation6], %s23
      %s25 = sshll.u32 [#allocation5], 4
      %s26 = int_to_ptr.vmem [resolvable:$true] %s25
      %31 = dma.hbm_to_vmem [thread:$0]  %s1, 13568, %s26, [#allocation6], 256, 256, 16
    $region9: #{tpu_custom_call.1} parent=1 // pred_fallthru
      _
    // Predicated region
    $region10: #{tpu_custom_call.1} parent=1 // pred_check
      _
    $region11: #{tpu_custom_call.1} parent=1 // pred_check_branch
      %33 = sbr.rel (0) target = $region13
    $region12: #{tpu_custom_call.1} parent=1 // pred_region
      %34 = dma.done [#allocation3], 128
    $region13: #{tpu_custom_call.1} parent=1 // pred_fallthru
      _
    // Predicated region
    $region14: #{tpu_custom_call.1} parent=1 // pred_check
      _
    $region15: #{tpu_custom_call.1} parent=1 // pred_check_branch
      %36 = sbr.rel (0) target = $region17
    $region16: #{tpu_custom_call.1} parent=1 // pred_region
      %37 = dma.done [#allocation6], 13568
    $region17: #{tpu_custom_call.1} parent=1 // pred_fallthru
      _
    %v38 = vld [vmem:[#allocation2] sm:$0xff]
    %v39 = vld [vmem:[#allocation5] sm:$0xff]
    %v40 = vld [vmem:[#allocation5 + $0x10] sm:$0xff]
    %v41 = vld [vmem:[#allocation5 + $0x20] ss:$0 sm:$0xff]
    %vm42 = vcmask 130048
    %v44 = vsel %vm42, %v38, 0
    %46 = vmatprep.subr.mxu0 0.0
    %47 = vmatpush1.msra.mxu0 %v39
    %48 = vmatprep.subr.mxu0 0.0
    %49 = vmatpush1.msra.mxu0 %v40
    %50 = vmatprep.subr.mxu0 0.0
    %51 = vmatpush1.msra.mxu0 0.0
    %52 = vmatprep.subr.mxu0 0.0
    %53 = vmatpush1.msra.mxu0 0.0
    %54 = vmatprep.subr.mxu0 0.0
    %55 = vmatpush1.msra.mxu0 0.0
    %56 = vmatprep.subr.mxu0 0.0
    %57 = vmatpush1.msra.mxu0 0.0
    %58 = vmatprep.subr.mxu0 0.0
    %59 = vmatpush1.msra.mxu0 0.0
    %60 = vmatprep.subr.mxu0 0.0
    %61 = vmatpush1.msra.mxu0 0.0
    %62 = vmatprep.subr.mxu0 0.0
    %63 = vmatpush1.msra.mxu0 0.0
    %64 = vmatprep.subr.mxu0 0.0
    %65 = vmatpush1.msra.mxu0 0.0
    %66 = vmatprep.subr.mxu0 0.0
    %67 = vmatpush1.msra.mxu0 0.0
    %68 = vmatprep.subr.mxu0 0.0
    %69 = vmatpush1.msra.mxu0 0.0
    %70 = vmatprep.subr.mxu0 0.0
    %71 = vmatpush1.msra.mxu0 0.0
    %72 = vmatprep.subr.mxu0 0.0
    %73 = vmatpush1.msra.mxu0 0.0
    %74 = vmatprep.subr.mxu0 0.0
    %75 = vmatpush1.msra.mxu0 0.0
    %76 = vmatprep.subr.mxu0 0.0
    %77 = vmatpush1.msra.mxu0 0.0
    %78 = vmatprep.subr.mxu0 0.0
    %79 = vmatpush1.msra.mxu0 0.0
    %80 = vmatprep.subr.mxu0 0.0
    %81 = vmatpush1.msra.mxu0 0.0
    %82 = vmatprep.subr.mxu0 0.0
    %83 = vmatpush1.msra.mxu0 0.0
    %84 = vmatprep.subr.mxu0 0.0
    %85 = vmatpush1.msra.mxu0 0.0
    %86 = vmatprep.subr.mxu0 0.0
    %87 = vmatpush1.msra.mxu0 0.0
    %88 = vmatprep.subr.mxu0 0.0
    %89 = vmatpush1.msra.mxu0 0.0
    %90 = vmatprep.subr.mxu0 0.0
    %91 = vmatpush1.msra.mxu0 0.0
    %92 = vmatprep.subr.mxu0 0.0
    %93 = vmatpush1.msra.mxu0 0.0
    %94 = vmatprep.subr.mxu0 0.0
    %95 = vmatpush1.msra.mxu0 0.0
    %96 = vmatprep.subr.mxu0 0.0
    %97 = vmatpush1.msra.mxu0 0.0
    %98 = vmatprep.subr.mxu0 0.0
    %99 = vmatpush1.msra.mxu0 0.0
    %100 = vmatprep.subr.mxu0 0.0
    %101 = vmatpush1.msra.mxu0 0.0
    %102 = vmatprep.subr.mxu0 0.0
    %103 = vmatpush1.msra.mxu0 0.0
    %104 = vmatprep.subr.mxu0 0.0
    %105 = vmatpush1.msra.mxu0 0.0
    %106 = vmatprep.subr.mxu0 0.0
    %107 = vmatpush1.msra.mxu0 0.0
    %108 = vmatprep.subr.mxu0 0.0
    %109 = vmatpush1.msra.mxu0 0.0
    %110 = vmatprep.mubr.f32.mxu0 0.0
    %111 = vmatmul.mubr.f32.gmra.mrb[0].mxu0 %v44
    %v112 = vpop.f32.mrb[0].mxu0
    %v113 = vadd.f32 %v41, %v112
    %v114 = vpop.f32.mrb[0].mxu0
    %115 = vdwg.mxu0
    %v116 = vmax.f32 %v113, 0.0
    %v117 = vld [vmem:[#allocation5 + $0x30] sm:$0xff]
    %v118 = vld [vmem:[#allocation5 + $0x38] sm:$0xff]
    %v119 = vld [vmem:[#allocation5 + $0x40] sm:$0xff]
    %v120 = vld [vmem:[#allocation5 + $0x48] sm:$0xff]
    %v121 = vld [vmem:[#allocation5 + $0x50] sm:$0xff]
    %v122 = vld [vmem:[#allocation5 + $0x58] sm:$0xff]
    %v123 = vld [vmem:[#allocation5 + $0x60] sm:$0xff]
    %v124 = vld [vmem:[#allocation5 + $0x68] sm:$0xff]
    %v125 = vld [vmem:[#allocation5 + $0x70] sm:$0xff]
    %v126 = vld [vmem:[#allocation5 + $0x78] sm:$0xff]
    %v127 = vld [vmem:[#allocation5 + $0x80] sm:$0xff]
    %v128 = vld [vmem:[#allocation5 + $0x88] sm:$0xff]
    %v129 = vld [vmem:[#allocation5 + $0x90] sm:$0xff]
    %v130 = vld [vmem:[#allocation5 + $0x98] sm:$0xff]
    %v131 = vld [vmem:[#allocation5 + $0xa0] sm:$0xff]
    %v132 = vld [vmem:[#allocation5 + $0xa8] sm:$0xff]
    %v133 = vld [vmem:[#allocation5 + $0xb0] sm:$0xff]
    %v134 = vld [vmem:[#allocation5 + $0xb8] sm:$0xff]
    %v135 = vld [vmem:[#allocation5 + $0xc0] sm:$0xff]
    %v136 = vld [vmem:[#allocation5 + $0xc8] sm:$0xff]
    %v137 = vld [vmem:[#allocation5 + $0xd0] sm:$0xff]
    %v138 = vld [vmem:[#allocation5 + $0xd8] sm:$0xff]
    %v139 = vld [vmem:[#allocation5 + $0xe0] sm:$0xff]
    %v140 = vld [vmem:[#allocation5 + $0xe8] sm:$0xff]
    %v141 = vld [vmem:[#allocation5 + $0xf0] sm:$0xff]
    %v142 = vld [vmem:[#allocation5 + $0xf8] sm:$0xff]
    %v143 = vld [vmem:[#allocation5 + $0x100] sm:$0xff]
    %v144 = vld [vmem:[#allocation5 + $0x108] sm:$0xff]
    %v145 = vld [vmem:[#allocation5 + $0x110] sm:$0xff]
    %v146 = vld [vmem:[#allocation5 + $0x118] sm:$0xff]
    %v147 = vld [vmem:[#allocation5 + $0x120] sm:$0xff]
    %v148 = vld [vmem:[#allocation5 + $0x128] sm:$0xff]
    %s149 = scalar_lea.vmem [#allocation5], 304
    %v150 = vld [vmem:[%s149] ss:$8 sm:$0x3]
    %v152 = vlaneseq
    %v153 = vshrl.u32 %v152, 7
    %v154 = vsub.s32 0, %v153
    %v155 = vrot.slane %v150, %v154
    %v156 = vlaneseq
    %v157 = vshrl.u32 %v156, 7
    %v158 = vsub.s32 1, %v157
    %v159 = vrot.slane %v150, %v158
    %162 = vmatprep.subr.mxu0 %v118
    %163 = vmatpush1.msra.mxu0 %v117
    %164 = vmatprep.subr.mxu0 %v120
    %165 = vmatpush1.msra.mxu0 %v119
    %166 = vmatprep.subr.mxu0 %v122
    %167 = vmatpush1.msra.mxu0 %v121
    %168 = vmatprep.subr.mxu0 %v124
    %169 = vmatpush1.msra.mxu0 %v123
    %170 = vmatprep.subr.mxu0 %v126
    %171 = vmatpush1.msra.mxu0 %v125
    %172 = vmatprep.subr.mxu0 %v128
    %173 = vmatpush1.msra.mxu0 %v127
    %174 = vmatprep.subr.mxu0 %v130
    %175 = vmatpush1.msra.mxu0 %v129
    %176 = vmatprep.subr.mxu0 %v132
    %177 = vmatpush1.msra.mxu0 %v131
    %178 = vmatprep.subr.mxu0 %v134
    %179 = vmatpush1.msra.mxu0 %v133
    %180 = vmatprep.subr.mxu0 %v136
    %181 = vmatpush1.msra.mxu0 %v135
    %182 = vmatprep.subr.mxu0 %v138
    %183 = vmatpush1.msra.mxu0 %v137
    %184 = vmatprep.subr.mxu0 %v140
    %185 = vmatpush1.msra.mxu0 %v139
    %186 = vmatprep.subr.mxu0 %v142
    %187 = vmatpush1.msra.mxu0 %v141
    %188 = vmatprep.subr.mxu0 %v144
    %189 = vmatpush1.msra.mxu0 %v143
    %190 = vmatprep.subr.mxu0 %v146
    %191 = vmatpush1.msra.mxu0 %v145
    %192 = vmatprep.subr.mxu0 %v148
    %193 = vmatpush1.msra.mxu0 %v147
    %194 = vmatprep.subr.mxu0 0.0
    %195 = vmatpush1.msra.mxu0 0.0
    %196 = vmatprep.subr.mxu0 0.0
    %197 = vmatpush1.msra.mxu0 0.0
    %198 = vmatprep.subr.mxu0 0.0
    %199 = vmatpush1.msra.mxu0 0.0
    %200 = vmatprep.subr.mxu0 0.0
    %201 = vmatpush1.msra.mxu0 0.0
    %202 = vmatprep.subr.mxu0 0.0
    %203 = vmatpush1.msra.mxu0 0.0
    %204 = vmatprep.subr.mxu0 0.0
    %205 = vmatpush1.msra.mxu0 0.0
    %206 = vmatprep.subr.mxu0 0.0
    %207 = vmatpush1.msra.mxu0 0.0
    %208 = vmatprep.subr.mxu0 0.0
    %209 = vmatpush1.msra.mxu0 0.0
    %210 = vmatprep.subr.mxu0 0.0
    %211 = vmatpush1.msra.mxu0 0.0
    %212 = vmatprep.subr.mxu0 0.0
    %213 = vmatpush1.msra.mxu0 0.0
    %214 = vmatprep.subr.mxu0 0.0
    %215 = vmatpush1.msra.mxu0 0.0
    %216 = vmatprep.subr.mxu0 0.0
    %217 = vmatpush1.msra.mxu0 0.0
    %218 = vmatprep.subr.mxu0 0.0
    %219 = vmatpush1.msra.mxu0 0.0
    %220 = vmatprep.subr.mxu0 0.0
    %221 = vmatpush1.msra.mxu0 0.0
    %222 = vmatprep.subr.mxu0 0.0
    %223 = vmatpush1.msra.mxu0 0.0
    %224 = vmatprep.subr.mxu0 0.0
    %225 = vmatpush1.msra.mxu0 0.0
    %226 = vmatprep.mubr.f32.mxu0 0.0
    %227 = vmatmul.mubr.f32.gmra.mrb[0].mxu0 %v116
    %v228 = vpop.f32.mrb[0].mxu0
    %v229 = vadd.f32 %v155, %v228
    %v230 = vpop.f32.mrb[0].mxu0
    %v231 = vadd.f32 %v159, %v230
    %232 = vdwg.mxu0
    %v233 = vmax.f32 %v229, 0.0
    %v234 = vmax.f32 %v231, 0.0
    %v235 = vld [vmem:[#allocation5 + $0x140] sm:$0xff]
    %v236 = vld [vmem:[#allocation5 + $0x150] sm:$0xff]
    %v237 = vld [vmem:[#allocation5 + $0x160] sm:$0xff]
    %v238 = vld [vmem:[#allocation5 + $0x170] sm:$0xff]
    %v239 = vld [vmem:[#allocation5 + $0x180] sm:$0xff]
    %v240 = vld [vmem:[#allocation5 + $0x190] sm:$0xff]
    %v241 = vld [vmem:[#allocation5 + $0x1a0] sm:$0xff]
    %v242 = vld [vmem:[#allocation5 + $0x1b0] sm:$0xff]
    %v243 = vld [vmem:[#allocation5 + $0x1c0] sm:$0xff]
    %v244 = vld [vmem:[#allocation5 + $0x1d0] sm:$0xff]
    %v245 = vld [vmem:[#allocation5 + $0x1e0] sm:$0xff]
    %v246 = vld [vmem:[#allocation5 + $0x1f0] sm:$0xff]
    %v247 = vld [vmem:[#allocation5 + $0x200] sm:$0xff]
    %v248 = vld [vmem:[#allocation5 + $0x210] sm:$0xff]
    %v249 = vld [vmem:[#allocation5 + $0x220] sm:$0xff]
    %v250 = vld [vmem:[#allocation5 + $0x230] sm:$0xff]
    %v251 = vld [vmem:[#allocation5 + $0x240] sm:$0xff]
    %v252 = vld [vmem:[#allocation5 + $0x250] sm:$0xff]
    %v253 = vld [vmem:[#allocation5 + $0x260] sm:$0xff]
    %v254 = vld [vmem:[#allocation5 + $0x270] sm:$0xff]
    %v255 = vld [vmem:[#allocation5 + $0x280] sm:$0xff]
    %v256 = vld [vmem:[#allocation5 + $0x290] sm:$0xff]
    %v257 = vld [vmem:[#allocation5 + $0x2a0] sm:$0xff]
    %v258 = vld [vmem:[#allocation5 + $0x2b0] sm:$0xff]
    %v259 = vld [vmem:[#allocation5 + $0x2c0] sm:$0xff]
    %v260 = vld [vmem:[#allocation5 + $0x2d0] sm:$0xff]
    %v261 = vld [vmem:[#allocation5 + $0x2e0] sm:$0xff]
    %v262 = vld [vmem:[#allocation5 + $0x2f0] sm:$0xff]
    %v263 = vld [vmem:[#allocation5 + $0x300] sm:$0xff]
    %v264 = vld [vmem:[#allocation5 + $0x310] sm:$0xff]
    %v265 = vld [vmem:[#allocation5 + $0x320] sm:$0xff]
    %v266 = vld [vmem:[#allocation5 + $0x330] sm:$0xff]
    %v267 = vld [vmem:[#allocation5 + $0x340] ss:$0 sm:$0xff]
    %268 = vmatprep.subr.mxu0 0.0
    %269 = vmatpush1.msra.mxu0 %v235
    %270 = vmatprep.subr.mxu0 0.0
    %271 = vmatpush1.msra.mxu0 %v236
    %272 = vmatprep.subr.mxu0 0.0
    %273 = vmatpush1.msra.mxu0 %v237
    %274 = vmatprep.subr.mxu0 0.0
    %275 = vmatpush1.msra.mxu0 %v238
    %276 = vmatprep.subr.mxu0 0.0
    %277 = vmatpush1.msra.mxu0 %v239
    %278 = vmatprep.subr.mxu0 0.0
    %279 = vmatpush1.msra.mxu0 %v240
    %280 = vmatprep.subr.mxu0 0.0
    %281 = vmatpush1.msra.mxu0 %v241
    %282 = vmatprep.subr.mxu0 0.0
    %283 = vmatpush1.msra.mxu0 %v242
    %284 = vmatprep.subr.mxu0 0.0
    %285 = vmatpush1.msra.mxu0 %v243
    %286 = vmatprep.subr.mxu0 0.0
    %287 = vmatpush1.msra.mxu0 %v244
    %288 = vmatprep.subr.mxu0 0.0
    %289 = vmatpush1.msra.mxu0 %v245
    %290 = vmatprep.subr.mxu0 0.0
    %291 = vmatpush1.msra.mxu0 %v246
    %292 = vmatprep.subr.mxu0 0.0
    %293 = vmatpush1.msra.mxu0 %v247
    %294 = vmatprep.subr.mxu0 0.0
    %295 = vmatpush1.msra.mxu0 %v248
    %296 = vmatprep.subr.mxu0 0.0
    %297 = vmatpush1.msra.mxu0 %v249
    %298 = vmatprep.subr.mxu0 0.0
    %299 = vmatpush1.msra.mxu0 %v250
    %300 = vmatprep.subr.mxu0 0.0
    %301 = vmatpush1.msra.mxu0 %v251
    %302 = vmatprep.subr.mxu0 0.0
    %303 = vmatpush1.msra.mxu0 %v252
    %304 = vmatprep.subr.mxu0 0.0
    %305 = vmatpush1.msra.mxu0 %v253
    %306 = vmatprep.subr.mxu0 0.0
    %307 = vmatpush1.msra.mxu0 %v254
    %308 = vmatprep.subr.mxu0 0.0
    %309 = vmatpush1.msra.mxu0 %v255
    %310 = vmatprep.subr.mxu0 0.0
    %311 = vmatpush1.msra.mxu0 %v256
    %312 = vmatprep.subr.mxu0 0.0
    %313 = vmatpush1.msra.mxu0 %v257
    %314 = vmatprep.subr.mxu0 0.0
    %315 = vmatpush1.msra.mxu0 %v258
    %316 = vmatprep.subr.mxu0 0.0
    %317 = vmatpush1.msra.mxu0 %v259
    %318 = vmatprep.subr.mxu0 0.0
    %319 = vmatpush1.msra.mxu0 %v260
    %320 = vmatprep.subr.mxu0 0.0
    %321 = vmatpush1.msra.mxu0 %v261
    %322 = vmatprep.subr.mxu0 0.0
    %323 = vmatpush1.msra.mxu0 %v262
    %324 = vmatprep.subr.mxu0 0.0
    %325 = vmatpush1.msra.mxu0 %v263
    %326 = vmatprep.subr.mxu0 0.0
    %327 = vmatpush1.msra.mxu0 %v264
    %328 = vmatprep.subr.mxu0 0.0
    %329 = vmatpush1.msra.mxu0 %v265
    %330 = vmatprep.subr.mxu0 0.0
    %331 = vmatpush1.msra.mxu0 %v266
    %332 = vmatprep.mubr.f32.mxu0 %v234
    %333 = vmatmul.mubr.f32.gmra.mrb[0].mxu0 %v233
    %v334 = vpop.f32.mrb[0].mxu0
    %v335 = vadd.f32 %v267, %v334
    %v336 = vpop.f32.mrb[0].mxu0
    %337 = vdwg.mxu0
    %v338 = vxor.u32 %v335, 2147483648
    %v339 = vmul.f32 %v338, 1.442695
    %v340 = vpow.pop %v339
    %v341 = vadd.f32 %v340, 1.0
    %v342 = vrcp.pop %v341
    %v343 = vmul.f32 1.0, %v342
    %344 = vst [vmem:[#allocation7] sm:$0xff] %v343
    // Predicated region
    $region18: #{tpu_custom_call.1} parent=1 // pred_check
      _
    $region19: #{tpu_custom_call.1} parent=1 // pred_check_branch
      %346 = sbr.rel (0) target = $region21
    $region20: #{tpu_custom_call.1} parent=1 // pred_region
      %s348 = ssub.s32 128, 128
      %349 = vsyncadd [#allocation4], %s348
      %s351 = sshll.u32 [#allocation7], 4
      %s352 = int_to_ptr.vmem [resolvable:$true] %s351
      %354 = dma.vmem_to_hbm [thread:$0]  %s352, 128, %s2, [#allocation4]
    $region21: #{tpu_custom_call.1} parent=1 // pred_fallthru
      _
    // Predicated region
    $region22: #{tpu_custom_call.1} parent=1 // pred_check
      _
    $region23: #{tpu_custom_call.1} parent=1 // pred_check_branch
      %356 = sbr.rel (0) target = $region25
    $region24: #{tpu_custom_call.1} parent=1 // pred_region
      %357 = dma.done [#allocation4], 128
    $region25: #{tpu_custom_call.1} parent=1 // pred_fallthru
      _
    %358 = vsyncpa [#allocation3], 1
    %359 = vsyncpa [#allocation6], 1
    %360 = vsyncpa [#allocation4], 1

</llo_original>
